<compile_context>
chip_gen: v7x
topology: tpu7x:2x2x1
jax: 0.10.0
libtpu: 0.0.40
codegen_flags: <defaults>
</compile_context>

<pallas_src>
import functools

import jax
import jax.numpy as jnp
from jax.experimental import pallas as pl
from jax.experimental.pallas import tpu as pltpu


# ---------------------------------------------------------------------------
# Chip policy (generation-aware VMEM / TensorCore tiling decisions)
# ---------------------------------------------------------------------------

def _chip_policy():
    kind = ""
    try:
        kind = jax.devices()[0].device_kind.lower()
    except Exception:
        pass
    vmem_phys = None
    try:
        info = pltpu.get_tpu_info()
        v = int(getattr(info, "vmem_capacity_bytes", 0) or 0)
        if v >= (32 << 20):
            vmem_phys = v
    except Exception:
        pass

    if "v7" in kind:
        # 64 MiB VMEM per TensorCore, 2 TCs per chip sharing HBM.
        n_tc = 2
        vmem_phys = min(vmem_phys or (64 << 20), 64 << 20)
        vmem_cap = 48 << 20
        block_cap = 5 << 20
    elif ("v6" in kind) or ("v5" in kind):
        # 128 MiB VMEM, single TensorCore: bigger blocks, higher VMEM limit.
        n_tc = 1
        vmem_phys = vmem_phys or (128 << 20)
        vmem_cap = 100 << 20
        block_cap = 12 << 20
    else:
        # Unknown part: conservative (v7x-like) assumptions, single TC.
        n_tc = 1
        vmem_phys = vmem_phys or (64 << 20)
        vmem_cap = 48 << 20
        block_cap = 5 << 20

    vmem_cap = max(16 << 20, min(vmem_cap, vmem_phys - (8 << 20)))
    return {"n_tc": n_tc, "vmem_cap": vmem_cap, "block_cap": block_cap}


def _block_diag(x, y):
    r1, c1 = x.shape
    r2, c2 = y.shape
    top = jnp.concatenate([x, jnp.zeros((r1, c2), x.dtype)], axis=1)
    bot = jnp.concatenate([jnp.zeros((r2, c1), y.dtype), y], axis=1)
    return jnp.concatenate([top, bot], axis=0)


def _pick_batch_tile(N, slab_bytes, target_block_bytes, n_tc):
    """Largest batch fold that fits the block target and divides N; on
    multi-TC parts (v7x) prefer a grid-step count that is a multiple of the
    TC count so neither core idles."""
    nb = max(1, min(N, target_block_bytes // max(slab_bytes, 1)))
    while N % nb:
        nb -= 1
    if n_tc > 1 and N >= n_tc:
        cand = nb
        while cand >= 1:
            if N % cand == 0 and (N // cand) % n_tc == 0:
                nb = cand
                break
            cand -= 1
    return nb


# ---------------------------------------------------------------------------
# Single-pass kernel (whole (C, HW) slab per batch element resident in VMEM)
# ---------------------------------------------------------------------------

def _cbam_fused_kernel(a_ref, b_ref, w1_ref, w2_ref, a_out_ref, b_out_ref, *,
                       inv_hw, c, channels_last):
    a = a_ref[...]
    b = b_ref[...]
    nb = a.shape[0]
    red_axis = 1 if channels_last else 2

    # AdaptiveAvgPool2d(1) / AdaptiveMaxPool2d(1): f32 accumulation only on the
    # pooled (nb, C) vectors; the streaming slab is never copied to f32.
    # TODO(synk): if a v7x bundle dump shows the vld slot saturating, fuse the
    # sum/max pooling into one slab traversal (fori_loop over vreg-wide chunks).
    avg_a = jnp.sum(a, axis=red_axis, dtype=jnp.float32) * inv_hw
    mx_a = jnp.max(a, axis=red_axis).astype(jnp.float32)
    avg_b = jnp.sum(b, axis=red_axis, dtype=jnp.float32) * inv_hw
    mx_b = jnp.max(b, axis=red_axis).astype(jnp.float32)

    # A-path and B-path MLPs fused into two matmuls via block-diagonal weights:
    #   rows    = [avg ; max]                 (2*nb)
    #   columns = [A-channels | B-channels]   (2*C)
    pooled = jnp.concatenate(
        [jnp.concatenate([avg_a, mx_a], axis=0),
         jnp.concatenate([avg_b, mx_b], axis=0)], axis=1)            # (2nb, 2C)
    h = jnp.dot(pooled, w1_ref[...], preferred_element_type=jnp.float32)
    h = jnp.maximum(h, 0.0)                                          # (2nb, 2Cr)
    # fc2 has no bias: fc2(h_avg) + fc2(h_max) == fc2(h_avg + h_max).
    h = h[:nb] + h[nb:]                                              # (nb, 2Cr)
    logits = jnp.dot(h, w2_ref[...], preferred_element_type=jnp.float32)
    gates = jax.nn.sigmoid(logits)                                   # (nb, 2C)
    att_a = gates[:, :c]        # ChannelAttention(A)
    att_b = gates[:, c:]        # ChannelAttention(B)

    # CBAM cross-gating: A gets B's attention, B gets A's attention.  Fused
    # broadcast multiply in the input dtype (the gate is never materialized
    # at slab size).
    if channels_last:
        ga = att_b[:, None, :]
        gb = att_a[:, None, :]
    else:
        ga = att_b[:, :, None]
        gb = att_a[:, :, None]
    a_out_ref[...] = (a * ga.astype(a.dtype)).astype(a_out_ref.dtype)
    b_out_ref[...] = (b * gb.astype(b.dtype)).astype(b_out_ref.dtype)


def _cbam_single_pass(a3, b3, w1a, w2a, w1b, w2b, C, HW, channels_last,
                      slab_bytes, target_block_bytes, pol):
    N = a3.shape[0]
    nb = _pick_batch_tile(N, slab_bytes, target_block_bytes, pol["n_tc"])

    # Pre-transpose + block-diagonal pack the 1x1-conv weights once outside the
    # grid (tiny) so both in-kernel matmuls are standard orientation.
    w1_bd = _block_diag(w1a.T, w1b.T)     # (2C, 2Cr)
    w2_bd = _block_diag(w2a.T, w2b.T)     # (2Cr, 2C)

    block = (nb, HW, C) if channels_last else (nb, C, HW)
    feat_spec = pl.BlockSpec(block, lambda n: (n, 0, 0))
    # Full-array, grid-invariant weight blocks: DMA'd once, not per grid step.
    w1_spec = pl.BlockSpec(w1_bd.shape, lambda n: (0, 0))
    w2_spec = pl.BlockSpec(w2_bd.shape, lambda n: (0, 0))

    block_bytes = nb * slab_bytes
    # 4 feature slabs x double buffering + weights + internal scratch slack.
    vmem_limit = int(min(pol["vmem_cap"],
                         max(16 << 20, 8 * block_bytes + (4 << 20))))

    kernel = functools.partial(_cbam_fused_kernel, inv_hw=1.0 / HW, c=C,
                               channels_last=channels_last)

    # TODO(synk): on v5e (deepest HBM-bound part) sweep
    # pipeline_mode=pl.Buffered(3) on the two input feat_specs.
    return pl.pallas_call(
        kernel,
        grid=(N // nb,),
        in_specs=[feat_spec, feat_spec, w1_spec, w2_spec],
        out_specs=[feat_spec, feat_spec],
        out_shape=[jax.ShapeDtypeStruct(a3.shape, a3.dtype),
                   jax.ShapeDtypeStruct(b3.shape, b3.dtype)],
        input_output_aliases={0: 0, 1: 1},
        compiler_params=pltpu.CompilerParams(
            dimension_semantics=("parallel",),
            vmem_limit_bytes=vmem_limit),
    )(a3, b3, w1_bd, w2_bd)


# ---------------------------------------------------------------------------
# Two-pass fallback (slab too large for VMEM): tiled pooling + tiled gating
# ---------------------------------------------------------------------------

def _pool_kernel(a_ref, b_ref, sa_ref, ma_ref, sb_ref, mb_ref, *,
                 hw_total, tile_hw, channels_last, need_mask):
    h_idx = pl.program_id(1)
    red_axis = 1 if channels_last else 2

    def pooled(x):
        if need_mask:
            iota = jax.lax.broadcasted_iota(jnp.int32, x.shape, red_axis)
            valid = (h_idx * tile_hw + iota) < hw_total
            xs = jnp.where(valid, x, jnp.zeros((), x.dtype))
            xm = jnp.where(valid, x, jnp.array(-jnp.inf, x.dtype))
        else:
            xs = xm = x
        s = jnp.sum(xs, axis=red_axis, dtype=jnp.float32, keepdims=True)
        m = jnp.max(xm, axis=red_axis, keepdims=True).astype(jnp.float32)
        return s, m

    sa, ma = pooled(a_ref[...])
    sb, mb = pooled(b_ref[...])

    @pl.when(h_idx == 0)
    def _():
        sa_ref[...] = jnp.zeros_like(sa_ref)
        sb_ref[...] = jnp.zeros_like(sb_ref)
        ma_ref[...] = jnp.full_like(ma_ref, -jnp.inf)
        mb_ref[...] = jnp.full_like(mb_ref, -jnp.inf)

    sa_ref[...] += sa
    sb_ref[...] += sb
    ma_ref[...] = jnp.maximum(ma_ref[...], ma)
    mb_ref[...] = jnp.maximum(mb_ref[...], mb)


def _apply_gate_kernel(a_ref, b_ref, ga_ref, gb_ref, ao_ref, bo_ref):
    a = a_ref[...]
    b = b_ref[...]
    ga = ga_ref[...]   # (1, C, 1) or (1, 1, C) – broadcasts against the slab
    gb = gb_ref[...]
    ao_ref[...] = (a * ga.astype(a.dtype)).astype(ao_ref.dtype)
    bo_ref[...] = (b * gb.astype(b.dtype)).astype(bo_ref.dtype)


def _cbam_two_pass(a3, b3, w1a, w2a, w1b, w2b, C, HW, channels_last, itemsize,
                   target_block_bytes, pol):
    N = a3.shape[0]
    dtype = a3.dtype

    align = 8 if channels_last else 128
    bytes_per_hw = max(C * itemsize, 1)
    max_hw_budget = max(align,
                        (target_block_bytes // bytes_per_hw) // align * align)
    if HW <= align:
        tile_hw = HW
    elif HW % align == 0:
        tile_hw = min(max_hw_budget, HW)
    else:
        tile_hw = min(max_hw_budget, (HW // align) * align)
    n_hw = pl.cdiv(HW, tile_hw)
    need_mask = (HW % tile_hw) != 0

    if channels_last:
        feat_block = (1, tile_hw, C)
        feat_map = lambda n, h: (n, h, 0)
        pooled_shape3, pooled_block = (N, 1, C), (1, 1, C)
    else:
        feat_block = (1, C, tile_hw)
        feat_map = lambda n, h: (n, 0, h)
        pooled_shape3, pooled_block = (N, C, 1), (1, C, 1)
    feat_spec = pl.BlockSpec(feat_block, feat_map)
    pooled_spec = pl.BlockSpec(pooled_block, lambda n, h: (n, 0, 0))
    pooled_sds = jax.ShapeDtypeStruct(pooled_shape3, jnp.float32)

    block_bytes = C * tile_hw * itemsize
    vmem_p1 = int(min(pol["vmem_cap"], max(16 << 20, 4 * block_bytes + (2 << 20))))
    vmem_p2 = int(min(pol["vmem_cap"], max(16 << 20, 8 * block_bytes + (2 << 20))))

    # Pass 1: tiled f32 sum/max pooling over HW (ragged tail masked in-kernel).
    pool = functools.partial(_pool_kernel, hw_total=HW, tile_hw=tile_hw,
                             channels_last=channels_last, need_mask=need_mask)
    sum_a, max_a, sum_b, max_b = pl.pallas_call(
        pool,
        grid=(N, n_hw),
        in_specs=[feat_spec, feat_spec],
        out_specs=[pooled_spec] * 4,
        out_shape=[pooled_sds] * 4,
        compiler_params=pltpu.CompilerParams(
            dimension_semantics=("parallel", "arbitrary"),
            vmem_limit_bytes=vmem_p1),
    )(a3, b3)

    # Channel MLP on the pooled (N, C) vectors is tiny -> plain XLA ops.
    def _attention(s, m, w1, w2):
        def mlp(v):
            return jnp.maximum(v @ w1.T, 0.0) @ w2.T
        return jax.nn.sigmoid(mlp(s * (1.0 / HW)) + mlp(m))

    att_a = _attention(sum_a.reshape(N, C), max_a.reshape(N, C), w1a, w2a)
    att_b = _attention(sum_b.reshape(N, C), max_b.reshape(N, C), w1b, w2b)
    # Cross-gating: A gets B's attention, B gets A's attention.
    if channels_last:
        gate_a, gate_b = att_b[:, None, :], att_a[:, None, :]
    else:
        gate_a, gate_b = att_b[:, :, None], att_a[:, :, None]

    # Pass 2: tiled broadcast gating multiply.
    return pl.pallas_call(
        _apply_gate_kernel,
        grid=(N, n_hw),
        in_specs=[feat_spec, feat_spec, pooled_spec, pooled_spec],
        out_specs=[feat_spec, feat_spec],
        out_shape=[jax.ShapeDtypeStruct(a3.shape, dtype),
                   jax.ShapeDtypeStruct(b3.shape, dtype)],
        input_output_aliases={0: 0, 1: 1},
        compiler_params=pltpu.CompilerParams(
            dimension_semantics=("parallel", "parallel"),
            vmem_limit_bytes=vmem_p2),
    )(a3, b3, gate_a, gate_b)


# ---------------------------------------------------------------------------
# Public wrapper
# ---------------------------------------------------------------------------

def cbam_forward(A, B, w1a, w2a, w1b, w2b, *, data_format="NCHW",
                 target_block_bytes=None, force_two_pass=False):
    """CBAM dual cross-gating forward: returns (A * CA2(B), B * CA1(A)).

    A, B        : (N, C, H, W) if data_format == "NCHW", (N, H, W, C) if "NHWC".
    w1a/w1b     : (C // r, C) fc1 1x1-conv weights (no bias).
    w2a/w2b     : (C, C // r) fc2 1x1-conv weights (no bias).

    The NHWC path keeps channels on lanes (lane-dense unmasked stores) at zero
    relayout cost for callers that already hold channels-last activations; the
    NCHW path keeps HW on lanes and avoids wrapper transposes (an extra HBM
    round-trip would cost more than masked stores for this mem-bound op).
    """
    if data_format not in ("NCHW", "NHWC"):
        raise ValueError(f"data_format must be NCHW or NHWC, got {data_format}")
    channels_last = data_format == "NHWC"
    if channels_last:
        N, H, W, C = A.shape
    else:
        N, C, H, W = A.shape
    HW = H * W
    Cr = w1a.shape[0]
    assert B.shape == A.shape
    assert w1a.shape == (Cr, C) and w2a.shape == (C, Cr)
    assert w1b.shape == (Cr, C) and w2b.shape == (C, Cr)

    pol = _chip_policy()
    itemsize = jnp.dtype(A.dtype).itemsize
    slab_bytes = C * HW * itemsize

    # Single-pass needs 4 feature slabs x double buffering resident in VMEM.
    max_single_pass_slab = (pol["vmem_cap"] - (4 << 20)) // 8
    two_pass = force_two_pass or slab_bytes > max_single_pass_slab

    if target_block_bytes is None:
        target_block_bytes = pol["block_cap"]
    target_block_bytes = int(min(max(target_block_bytes, 256 << 10),
                                 max_single_pass_slab))

    if channels_last:
        a3 = A.reshape(N, HW, C)
        b3 = B.reshape(N, HW, C)
    else:
        a3 = A.reshape(N, C, HW)
        b3 = B.reshape(N, C, HW)

    if two_pass:
        out_a, out_b = _cbam_two_pass(a3, b3, w1a, w2a, w1b, w2b, C, HW,
                                      channels_last, itemsize,
                                      target_block_bytes, pol)
    else:
        out_a, out_b = _cbam_single_pass(a3, b3, w1a, w2a, w1b, w2b, C, HW,
                                         channels_last, slab_bytes,
                                         target_block_bytes, pol)

    return out_a.reshape(A.shape), out_b.reshape(B.shape)


# ---------------------------------------------------------------------------
# Reference + tests
# ---------------------------------------------------------------------------

def _reference_nchw(A, B, w1a, w2a, w1b, w2b):
    def channel_attention(x, w1, w2):
        avg = jnp.mean(x, axis=(2, 3))
        mx = jnp.max(x, axis=(2, 3))

        def mlp(v):
            return jnp.maximum(v @ w1.T, 0.0) @ w2.T

        return jax.nn.sigmoid(mlp(avg) + mlp(mx))[:, :, None, None]

    ca_a = channel_attention(A, w1a, w2a)
    ca_b = channel_attention(B, w1b, w2b)
    return A * ca_b, B * ca_a


if __name__ == "__main__":
    key = jax.random.PRNGKey(0)

    def make_case(k, N, C, H, W, reduction):
        k_a, k_b, k1, k2, k3, k4 = jax.random.split(k, 6)
        Cr = max(C // reduction, 1)
        A = jax.random.normal(k_a, (N, C, H, W), dtype=jnp.float32)
        B = jax.random.normal(k_b, (N, C, H, W), dtype=jnp.float32)
        w1a = 0.1 * jax.random.normal(k1, (Cr, C), dtype=jnp.float32)
        w2a = 0.1 * jax.random.normal(k2, (C, Cr), dtype=jnp.float32)
        w1b = 0.1 * jax.random.normal(k3, (Cr, C), dtype=jnp.float32)
        w2b = 0.1 * jax.random.normal(k4, (C, Cr), dtype=jnp.float32)
        return A, B, w1a, w2a, w1b, w2b

    ka, kb, kc = jax.random.split(key, 3)

    # Case 1: NCHW, H*W a multiple of 128 (lane-dense HW) -> single-pass kernel.
    A, B, w1a, w2a, w1b, w2b = make_case(ka, N=2, C=32, H=16, W=16, reduction=16)
    out_a, out_b = cbam_forward(A, B, w1a, w2a, w1b, w2b, data_format="NCHW")
    jax.block_until_ready((out_a, out_b))
    ref_a, ref_b = _reference_nchw(A, B, w1a, w2a, w1b, w2b)
    assert jnp.allclose(out_a, ref_a, atol=1e-5, rtol=1e-5)
    assert jnp.allclose(out_b, ref_b, atol=1e-5, rtol=1e-5)

    # Case 2: NHWC (channels on lanes) -> single-pass, lane-dense stores.
    A, B, w1a, w2a, w1b, w2b = make_case(kb, N=2, C=128, H=7, W=7, reduction=16)
    A_nhwc = jnp.transpose(A, (0, 2, 3, 1))
    B_nhwc = jnp.transpose(B, (0, 2, 3, 1))
    out_a, out_b = cbam_forward(A_nhwc, B_nhwc, w1a, w2a, w1b, w2b,
                                data_format="NHWC")
    jax.block_until_ready((out_a, out_b))
    ref_a, ref_b = _reference_nchw(A, B, w1a, w2a, w1b, w2b)
    assert jnp.allclose(jnp.transpose(out_a, (0, 3, 1, 2)), ref_a,
                        atol=1e-5, rtol=1e-5)
    assert jnp.allclose(jnp.transpose(out_b, (0, 3, 1, 2)), ref_b,
                        atol=1e-5, rtol=1e-5)

    # Case 3: forced two-pass fallback (tiled HW reduction + gating) with a
    # ragged H*W (144 -> two 128-lane tiles, masked remainder).
    A, B, w1a, w2a, w1b, w2b = make_case(kc, N=2, C=32, H=12, W=12, reduction=16)
    out_a, out_b = cbam_forward(A, B, w1a, w2a, w1b, w2b, data_format="NCHW",
                                force_two_pass=True)
    jax.block_until_ready((out_a, out_b))
    ref_a, ref_b = _reference_nchw(A, B, w1a, w2a, w1b, w2b)
    assert jnp.allclose(out_a, ref_a, atol=1e-5, rtol=1e-5)
    assert jnp.allclose(out_b, ref_b, atol=1e-5, rtol=1e-5)

    print("KERNEL_OK")
</pallas_src>

<mosaic_0001>
module attributes {stable_mosaic.version = 11 : i64} {
  func.func @_cbam_fused_kernel(%arg0: i32, %arg1: memref<2x32x256xf32, #tpu.memory_space<vmem>>, %arg2: memref<2x32x256xf32, #tpu.memory_space<vmem>>, %arg3: memref<64x4xf32, #tpu.memory_space<vmem>>, %arg4: memref<4x64xf32, #tpu.memory_space<vmem>>, %arg5: memref<2x32x256xf32, #tpu.memory_space<vmem>>, %arg6: memref<2x32x256xf32, #tpu.memory_space<vmem>>) attributes {dimension_semantics = [#tpu.dimension_semantics<parallel>], iteration_bounds = array<i64: 1>, scalar_prefetch = 0 : i64, scratch_operands = 0 : i64, tpu.core_type = #tpu.core_type<tc>, window_params = [{transform_indices = @transform_0, window_bounds = array<i64: 2, 32, 256>}, {transform_indices = @transform_1, window_bounds = array<i64: 2, 32, 256>}, {pipeline_mode = #tpu.pipeline_mode<synchronous>, transform_indices = @transform_2, window_bounds = array<i64: 64, 4>}, {pipeline_mode = #tpu.pipeline_mode<synchronous>, transform_indices = @transform_3, window_bounds = array<i64: 4, 64>}, {transform_indices = @transform_4, window_bounds = array<i64: 2, 32, 256>}, {transform_indices = @transform_5, window_bounds = array<i64: 2, 32, 256>}]} {
    %c0 = arith.constant 0 : index
    %c0_0 = arith.constant 0 : index
    %c0_1 = arith.constant 0 : index
    %0 = vector.load %arg1[%c0, %c0_0, %c0_1] : memref<2x32x256xf32, #tpu.memory_space<vmem>>, vector<2x32x256xf32>
    %c0_2 = arith.constant 0 : index
    %c0_3 = arith.constant 0 : index
    %c0_4 = arith.constant 0 : index
    %1 = vector.load %arg2[%c0_2, %c0_3, %c0_4] : memref<2x32x256xf32, #tpu.memory_space<vmem>>, vector<2x32x256xf32>
    %cst = arith.constant dense<0.000000e+00> : vector<2x32xf32>
    %2 = vector.multi_reduction <add>, %0, %cst [2] : vector<2x32x256xf32> to vector<2x32xf32>
    %cst_5 = arith.constant 3.906250e-03 : f32
    %3 = vector.broadcast %cst_5 : f32 to vector<2x32xf32>
    %4 = arith.mulf %2, %3 : vector<2x32xf32>
    %cst_6 = arith.constant dense<0xFF800000> : vector<2x32xf32>
    %5 = vector.multi_reduction <maximumf>, %0, %cst_6 [2] : vector<2x32x256xf32> to vector<2x32xf32>
    %cst_7 = arith.constant dense<0.000000e+00> : vector<2x32xf32>
    %6 = vector.multi_reduction <add>, %1, %cst_7 [2] : vector<2x32x256xf32> to vector<2x32xf32>
    %cst_8 = arith.constant 3.906250e-03 : f32
    %7 = vector.broadcast %cst_8 : f32 to vector<2x32xf32>
    %8 = arith.mulf %6, %7 : vector<2x32xf32>
    %cst_9 = arith.constant dense<0xFF800000> : vector<2x32xf32>
    %9 = vector.multi_reduction <maximumf>, %1, %cst_9 [2] : vector<2x32x256xf32> to vector<2x32xf32>
    %10 = tpu.concatenate %4, %5 in 0 : vector<2x32xf32>, vector<2x32xf32> -> vector<4x32xf32>
    %11 = tpu.concatenate %8, %9 in 0 : vector<2x32xf32>, vector<2x32xf32> -> vector<4x32xf32>
    %12 = tpu.concatenate %10, %11 in 1 : vector<4x32xf32>, vector<4x32xf32> -> vector<4x64xf32>
    %c0_10 = arith.constant 0 : index
    %c0_11 = arith.constant 0 : index
    %13 = vector.load %arg3[%c0_10, %c0_11] : memref<64x4xf32, #tpu.memory_space<vmem>>, vector<64x4xf32>
    %cst_12 = arith.constant dense<0.000000e+00> : vector<4x4xf32>
    %14 = tpu.matmul %12, %13, %cst_12 {dimension_numbers = #tpu.dot_dimension_numbers<[1], [0], [0], [1], [0, 0, 1, 1], [], []>} : vector<4x64xf32>, vector<64x4xf32>, vector<4x4xf32> -> vector<4x4xf32>
    %cst_13 = arith.constant 0.000000e+00 : f32
    %15 = vector.broadcast %cst_13 : f32 to vector<4x4xf32>
    %16 = arith.maximumf %14, %15 : vector<4x4xf32>
    %17 = vector.extract_strided_slice %16 {offsets = [0, 0], sizes = [2, 4], strides = [1, 1]} : vector<4x4xf32> to vector<2x4xf32>
    %18 = vector.extract_strided_slice %16 {offsets = [2, 0], sizes = [2, 4], strides = [1, 1]} : vector<4x4xf32> to vector<2x4xf32>
    %19 = arith.addf %17, %18 : vector<2x4xf32>
    %c0_14 = arith.constant 0 : index
    %c0_15 = arith.constant 0 : index
    %20 = vector.load %arg4[%c0_14, %c0_15] : memref<4x64xf32, #tpu.memory_space<vmem>>, vector<4x64xf32>
    %cst_16 = arith.constant dense<0.000000e+00> : vector<2x64xf32>
    %21 = tpu.matmul %19, %20, %cst_16 {dimension_numbers = #tpu.dot_dimension_numbers<[1], [0], [0], [1], [0, 0, 1, 1], [], []>} : vector<2x4xf32>, vector<4x64xf32>, vector<2x64xf32> -> vector<2x64xf32>
    %22 = arith.negf %21 : vector<2x64xf32>
    %23 = math.exp %22 : vector<2x64xf32>
    %cst_17 = arith.constant 1.000000e+00 : f32
    %24 = vector.broadcast %cst_17 : f32 to vector<2x64xf32>
    %25 = arith.addf %24, %23 : vector<2x64xf32>
    %26 = arith.divf %24, %25 : vector<2x64xf32>
    %27 = vector.extract_strided_slice %26 {offsets = [0, 0], sizes = [2, 32], strides = [1, 1]} : vector<2x64xf32> to vector<2x32xf32>
    %28 = vector.extract_strided_slice %26 {offsets = [0, 32], sizes = [2, 32], strides = [1, 1]} : vector<2x64xf32> to vector<2x32xf32>
    %29 = vector.shape_cast %28 : vector<2x32xf32> to vector<2x32x1xf32>
    %30 = vector.shape_cast %27 : vector<2x32xf32> to vector<2x32x1xf32>
    %31 = vector.broadcast %29 : vector<2x32x1xf32> to vector<2x32x256xf32>
    %32 = arith.mulf %0, %31 : vector<2x32x256xf32>
    %c0_18 = arith.constant 0 : index
    %c0_19 = arith.constant 0 : index
    %c0_20 = arith.constant 0 : index
    %33 = vector.load %arg5[%c0_18, %c0_19, %c0_20] : memref<2x32x256xf32, #tpu.memory_space<vmem>>, vector<2x32x256xf32>
    tpu.vector_store %arg5[%c0_18, %c0_19, %c0_20], %32 {strides = array<i32>} : memref<2x32x256xf32, #tpu.memory_space<vmem>>, vector<2x32x256xf32>,
    %34 = vector.broadcast %30 : vector<2x32x1xf32> to vector<2x32x256xf32>
    %35 = arith.mulf %1, %34 : vector<2x32x256xf32>
    %c0_21 = arith.constant 0 : index
    %c0_22 = arith.constant 0 : index
    %c0_23 = arith.constant 0 : index
    %36 = vector.load %arg6[%c0_21, %c0_22, %c0_23] : memref<2x32x256xf32, #tpu.memory_space<vmem>>, vector<2x32x256xf32>
    tpu.vector_store %arg6[%c0_21, %c0_22, %c0_23], %35 {strides = array<i32>} : memref<2x32x256xf32, #tpu.memory_space<vmem>>, vector<2x32x256xf32>,
    return
  }
  func.func @transform_0(%arg0: i32) -> (i32, i32, i32) {
    %c0_i32 = arith.constant 0 : i32
    %c0_i32_0 = arith.constant 0 : i32
    %c0_i32_1 = arith.constant 0 : i32
    return %arg0, %c0_i32, %c0_i32_0 : i32, i32, i32
  }
  func.func @transform_1(%arg0: i32) -> (i32, i32, i32) {
    %c0_i32 = arith.constant 0 : i32
    %c0_i32_0 = arith.constant 0 : i32
    %c0_i32_1 = arith.constant 0 : i32
    return %arg0, %c0_i32, %c0_i32_0 : i32, i32, i32
  }
  func.func @transform_2(%arg0: i32) -> (i32, i32) {
    %c0_i32 = arith.constant 0 : i32
    %c0_i32_0 = arith.constant 0 : i32
    %c0_i32_1 = arith.constant 0 : i32
    return %c0_i32, %c0_i32_0 : i32, i32
  }
  func.func @transform_3(%arg0: i32) -> (i32, i32) {
    %c0_i32 = arith.constant 0 : i32
    %c0_i32_0 = arith.constant 0 : i32
    %c0_i32_1 = arith.constant 0 : i32
    return %c0_i32, %c0_i32_0 : i32, i32
  }
  func.func @transform_4(%arg0: i32) -> (i32, i32, i32) {
    %c0_i32 = arith.constant 0 : i32
    %c0_i32_0 = arith.constant 0 : i32
    %c0_i32_1 = arith.constant 0 : i32
    return %arg0, %c0_i32, %c0_i32_0 : i32, i32, i32
  }
  func.func @transform_5(%arg0: i32) -> (i32, i32, i32) {
    %c0_i32 = arith.constant 0 : i32
    %c0_i32_0 = arith.constant 0 : i32
    %c0_i32_1 = arith.constant 0 : i32
    return %arg0, %c0_i32, %c0_i32_0 : i32, i32, i32
  }
}

</mosaic_0001>

<llo_original>
// kernel: tpu_custom_call.1
$region0: #{tpu_custom_call.1}
  #allocation0 [shape = 'u32[]', space=smem, size = 0x4, offset = 0x4, fixed_abs, tag = 'smem constant byte address 0x4 - core index']
  #allocation1 [shape = 'u32[144,128]{1,0:T(1,128)}', space=vmem, size = 0x12000, scoped, tag = 'internal scratch']
  %s0 = inlined_call_operand.hbm [shape: f32[2,32,256], index: 0, kind: input, shape index: {}, may-alias: {0,4}]
  %s1 = inlined_call_operand.hbm [shape: f32[2,32,256], index: 1, kind: input, shape index: {}, may-alias: {1,5}]
  %s2 = inlined_call_operand.vmem [shape: f32[64,4], index: 2, kind: input, shape index: {}]
  %s3 = inlined_call_operand.vmem [shape: f32[4,64], index: 3, kind: input, shape index: {}]
  %s4 = inlined_call_operand.hbm [shape: f32[2,32,256], index: 4, kind: output, shape index: {0}, may-alias: {0,4}]
  %s5 = inlined_call_operand.hbm [shape: f32[2,32,256], index: 5, kind: output, shape index: {1}, may-alias: {1,5}]
  %6 = xla_tuple %s4, %s5
  %s7 = sld [smem:[#allocation0]]
  $region42: #{tpu_custom_call.1} parent=0
    _
  %s9 = ssub.s32 1, %s7
  %s10 = scalar_select 0, %s9, %s7
  $region1: #{tpu_custom_call.1} parent=0
    #allocation2 [shape = 'u8[65536]{0}', space=vmem, size = 0x10000, scoped, tag = 'input window, operand 0, single buffered']
    #allocation3 [shape = 's32[1]{0}', space=sflag, size = 0x4, scoped, tag = 'scoped memory for tpu_custom_call.1']
    #allocation4 [shape = 's32[1]{0}', space=sflag, size = 0x4, scoped, tag = 'scoped memory for tpu_custom_call.1']
    #allocation5 [shape = 'u8[65536]{0}', space=vmem, size = 0x10000, scoped, tag = 'input window, operand 1, single buffered']
    #allocation6 [shape = 's32[1]{0}', space=sflag, size = 0x4, scoped, tag = 'scoped memory for tpu_custom_call.1']
    #allocation7 [shape = 'u8[65536]{0}', space=vmem, size = 0x10000, scoped, tag = 'output window, operand 0, single buffered']
    #allocation8 [shape = 'u8[65536]{0}', space=vmem, size = 0x10000, scoped, tag = 'output window, operand 1, single buffered']
    #allocation9 [shape = 's32[1]{0}', space=sflag, size = 0x4, scoped, tag = 'scoped memory for tpu_custom_call.1']
    %11 = vsyncpa [#allocation3], 0
    %12 = vsyncpa [#allocation6], 0
    %13 = vsyncpa [#allocation4], 0
    %14 = vsyncpa [#allocation9], 0
    // Predicated region
    $region2: #{tpu_custom_call.1} parent=1 // pred_check
      _
    $region3: #{tpu_custom_call.1} parent=1 // pred_check_branch
      %16 = sbr.rel (0) target = $region5
    $region4: #{tpu_custom_call.1} parent=1 // pred_region
      %s18 = ssub.s32 2048, 2048
      %19 = vsyncadd [#allocation3], %s18
      %s20 = sshll.u32 [#allocation2], 4
      %s21 = int_to_ptr.vmem [resolvable:$true] %s20
      %26 = dma.hbm_to_vmem [thread:$0]  %s0, 2048, %s21, [#allocation3], 256, 256, 16
    $region5: #{tpu_custom_call.1} parent=1 // pred_fallthru
      _
    // Predicated region
    $region6: #{tpu_custom_call.1} parent=1 // pred_check
      _
    $region7: #{tpu_custom_call.1} parent=1 // pred_check_branch
      %28 = sbr.rel (0) target = $region9
    $region8: #{tpu_custom_call.1} parent=1 // pred_region
      %s30 = ssub.s32 2048, 2048
      %31 = vsyncadd [#allocation6], %s30
      %s32 = sshll.u32 [#allocation5], 4
      %s33 = int_to_ptr.vmem [resolvable:$true] %s32
      %38 = dma.hbm_to_vmem [thread:$0]  %s1, 2048, %s33, [#allocation6], 256, 256, 16
    $region9: #{tpu_custom_call.1} parent=1 // pred_fallthru
      _
    // Predicated region
    $region10: #{tpu_custom_call.1} parent=1 // pred_check
      _
    $region11: #{tpu_custom_call.1} parent=1 // pred_check_branch
      %40 = sbr.rel (0) target = $region13
    $region12: #{tpu_custom_call.1} parent=1 // pred_region
      _
    $region13: #{tpu_custom_call.1} parent=1 // pred_fallthru
      _
    // Predicated region
    $region14: #{tpu_custom_call.1} parent=1 // pred_check
      _
    $region15: #{tpu_custom_call.1} parent=1 // pred_check_branch
      %42 = sbr.rel (0) target = $region17
    $region16: #{tpu_custom_call.1} parent=1 // pred_region
      _
    $region17: #{tpu_custom_call.1} parent=1 // pred_fallthru
      _
    // Predicated region
    $region18: #{tpu_custom_call.1} parent=1 // pred_check
      _
    $region19: #{tpu_custom_call.1} parent=1 // pred_check_branch
      %44 = sbr.rel (0) target = $region21
    $region20: #{tpu_custom_call.1} parent=1 // pred_region
      %45 = dma.done [#allocation3], 2048
    $region21: #{tpu_custom_call.1} parent=1 // pred_fallthru
      _
    // Predicated region
    $region22: #{tpu_custom_call.1} parent=1 // pred_check
      _
    $region23: #{tpu_custom_call.1} parent=1 // pred_check_branch
      %47 = sbr.rel (0) target = $region25
    $region24: #{tpu_custom_call.1} parent=1 // pred_region
      %48 = dma.done [#allocation6], 2048
    $region25: #{tpu_custom_call.1} parent=1 // pred_fallthru
      _
    %v49 = vld [vmem:[#allocation2] sm:$0xff]
    %v50 = vld [vmem:[#allocation2 + $0x8] sm:$0xff]
    %v51 = vld [vmem:[#allocation2 + $0x10] sm:$0xff]
    %v52 = vld [vmem:[#allocation2 + $0x18] sm:$0xff]
    %v53 = vld [vmem:[#allocation2 + $0x20] sm:$0xff]
    %v54 = vld [vmem:[#allocation2 + $0x28] sm:$0xff]
    %v55 = vld [vmem:[#allocation2 + $0x30] sm:$0xff]
    %v56 = vld [vmem:[#allocation2 + $0x38] sm:$0xff]
    %v57 = vld [vmem:[#allocation2 + $0x40] sm:$0xff]
    %v58 = vld [vmem:[#allocation2 + $0x48] sm:$0xff]
    %v59 = vld [vmem:[#allocation2 + $0x50] sm:$0xff]
    %v60 = vld [vmem:[#allocation2 + $0x58] sm:$0xff]
    %v61 = vld [vmem:[#allocation2 + $0x60] sm:$0xff]
    %v62 = vld [vmem:[#allocation2 + $0x68] sm:$0xff]
    %v63 = vld [vmem:[#allocation2 + $0x70] sm:$0xff]
    %v64 = vld [vmem:[#allocation2 + $0x78] sm:$0xff]
    %v65 = vld [vmem:[#allocation5] sm:$0xff]
    %v66 = vld [vmem:[#allocation5 + $0x8] sm:$0xff]
    %v67 = vld [vmem:[#allocation5 + $0x10] sm:$0xff]
    %v68 = vld [vmem:[#allocation5 + $0x18] sm:$0xff]
    %v69 = vld [vmem:[#allocation5 + $0x20] sm:$0xff]
    %v70 = vld [vmem:[#allocation5 + $0x28] sm:$0xff]
    %v71 = vld [vmem:[#allocation5 + $0x30] sm:$0xff]
    %v72 = vld [vmem:[#allocation5 + $0x38] sm:$0xff]
    %v73 = vld [vmem:[#allocation5 + $0x40] sm:$0xff]
    %v74 = vld [vmem:[#allocation5 + $0x48] sm:$0xff]
    %v75 = vld [vmem:[#allocation5 + $0x50] sm:$0xff]
    %v76 = vld [vmem:[#allocation5 + $0x58] sm:$0xff]
    %v77 = vld [vmem:[#allocation5 + $0x60] sm:$0xff]
    %v78 = vld [vmem:[#allocation5 + $0x68] sm:$0xff]
    %v79 = vld [vmem:[#allocation5 + $0x70] sm:$0xff]
    %v80 = vld [vmem:[#allocation5 + $0x78] sm:$0xff]
    %v81 = vadd.f32 %v49, %v50
    %82 = vadd.xlane.f32.xlu0 %v81
    %v83 = vpop.xlane.xlu0 %82
    %v84 = vadd.f32 %v51, %v52
    %85 = vadd.xlane.f32.xlu0 %v84
    %v86 = vpop.xlane.xlu0 %85
    %v87 = vadd.f32 %v53, %v54
    %88 = vadd.xlane.f32.xlu0 %v87
    %v89 = vpop.xlane.xlu0 %88
    %v90 = vadd.f32 %v55, %v56
    %91 = vadd.xlane.f32.xlu0 %v90
    %v92 = vpop.xlane.xlu0 %91
    %v93 = vadd.f32 %v57, %v58
    %94 = vadd.xlane.f32.xlu0 %v93
    %v95 = vpop.xlane.xlu0 %94
    %v96 = vadd.f32 %v59, %v60
    %97 = vadd.xlane.f32.xlu0 %v96
    %v98 = vpop.xlane.xlu0 %97
    %v99 = vadd.f32 %v61, %v62
    %100 = vadd.xlane.f32.xlu0 %v99
    %v101 = vpop.xlane.xlu0 %100
    %v102 = vadd.f32 %v63, %v64
    %103 = vadd.xlane.f32.xlu0 %v102
    %v104 = vpop.xlane.xlu0 %103
    %v105 = vmul.f32 %v83, 0.00390625
    %v106 = vmul.f32 %v86, 0.00390625
    %v107 = vmul.f32 %v89, 0.00390625
    %v108 = vmul.f32 %v92, 0.00390625
    %v109 = vmul.f32 %v95, 0.00390625
    %v110 = vmul.f32 %v98, 0.00390625
    %v111 = vmul.f32 %v101, 0.00390625
    %v112 = vmul.f32 %v104, 0.00390625
    %v113 = vmax.f32 %v49, %v50
    %114 = vmax.xlane.f32.xlu0 %v113
    %v115 = vpop.xlane.xlu0 %114
    %v116 = vmax.f32 %v51, %v52
    %117 = vmax.xlane.f32.xlu0 %v116
    %v118 = vpop.xlane.xlu0 %117
    %v119 = vmax.f32 %v53, %v54
    %120 = vmax.xlane.f32.xlu0 %v119
    %v121 = vpop.xlane.xlu0 %120
    %v122 = vmax.f32 %v55, %v56
    %123 = vmax.xlane.f32.xlu0 %v122
    %v124 = vpop.xlane.xlu0 %123
    %v125 = vmax.f32 %v57, %v58
    %126 = vmax.xlane.f32.xlu0 %v125
    %v127 = vpop.xlane.xlu0 %126
    %v128 = vmax.f32 %v59, %v60
    %129 = vmax.xlane.f32.xlu0 %v128
    %v130 = vpop.xlane.xlu0 %129
    %v131 = vmax.f32 %v61, %v62
    %132 = vmax.xlane.f32.xlu0 %v131
    %v133 = vpop.xlane.xlu0 %132
    %v134 = vmax.f32 %v63, %v64
    %135 = vmax.xlane.f32.xlu0 %v134
    %v136 = vpop.xlane.xlu0 %135
    %v137 = vadd.f32 %v65, %v66
    %138 = vadd.xlane.f32.xlu0 %v137
    %v139 = vpop.xlane.xlu0 %138
    %v140 = vadd.f32 %v67, %v68
    %141 = vadd.xlane.f32.xlu0 %v140
    %v142 = vpop.xlane.xlu0 %141
    %v143 = vadd.f32 %v69, %v70
    %144 = vadd.xlane.f32.xlu0 %v143
    %v145 = vpop.xlane.xlu0 %144
    %v146 = vadd.f32 %v71, %v72
    %147 = vadd.xlane.f32.xlu0 %v146
    %v148 = vpop.xlane.xlu0 %147
    %v149 = vadd.f32 %v73, %v74
    %150 = vadd.xlane.f32.xlu0 %v149
    %v151 = vpop.xlane.xlu0 %150
    %v152 = vadd.f32 %v75, %v76
    %153 = vadd.xlane.f32.xlu0 %v152
    %v154 = vpop.xlane.xlu0 %153
    %v155 = vadd.f32 %v77, %v78
    %156 = vadd.xlane.f32.xlu0 %v155
    %v157 = vpop.xlane.xlu0 %156
    %v158 = vadd.f32 %v79, %v80
    %159 = vadd.xlane.f32.xlu0 %v158
    %v160 = vpop.xlane.xlu0 %159
    %v161 = vmul.f32 %v139, 0.00390625
    %v162 = vmul.f32 %v142, 0.00390625
    %v163 = vmul.f32 %v145, 0.00390625
    %v164 = vmul.f32 %v148, 0.00390625
    %v165 = vmul.f32 %v151, 0.00390625
    %v166 = vmul.f32 %v154, 0.00390625
    %v167 = vmul.f32 %v157, 0.00390625
    %v168 = vmul.f32 %v160, 0.00390625
    %v169 = vmax.f32 %v65, %v66
    %170 = vmax.xlane.f32.xlu0 %v169
    %v171 = vpop.xlane.xlu0 %170
    %v172 = vmax.f32 %v67, %v68
    %173 = vmax.xlane.f32.xlu0 %v172
    %v174 = vpop.xlane.xlu0 %173
    %v175 = vmax.f32 %v69, %v70
    %176 = vmax.xlane.f32.xlu0 %v175
    %v177 = vpop.xlane.xlu0 %176
    %v178 = vmax.f32 %v71, %v72
    %179 = vmax.xlane.f32.xlu0 %v178
    %v180 = vpop.xlane.xlu0 %179
    %v181 = vmax.f32 %v73, %v74
    %182 = vmax.xlane.f32.xlu0 %v181
    %v183 = vpop.xlane.xlu0 %182
    %v184 = vmax.f32 %v75, %v76
    %185 = vmax.xlane.f32.xlu0 %v184
    %v186 = vpop.xlane.xlu0 %185
    %v187 = vmax.f32 %v77, %v78
    %188 = vmax.xlane.f32.xlu0 %v187
    %v189 = vpop.xlane.xlu0 %188
    %v190 = vmax.f32 %v79, %v80
    %191 = vmax.xlane.f32.xlu0 %v190
    %v192 = vpop.xlane.xlu0 %191
    %v201 = vlaneseq
    %v202 = vand.u32 %v201, 127
    %v203 = vlaneseq
    %v204 = vshrl.u32 %v203, 7
    %v205 = vsub.s32 %v202, %v204
    %v206 = vrot.slane %v105, %v205
    %v207 = vadd.s32 %v202, 4294967288
    %v208 = vlaneseq
    %v209 = vshrl.u32 %v208, 7
    %v210 = vsub.s32 %v207, %v209
    %v211 = vrot.slane %v106, %v210
    %vm212 = vcmask 130112
    %v213 = vsel %vm212, %v211, %v206
    %v214 = vadd.s32 %v202, 4294967280
    %v215 = vlaneseq
    %v216 = vshrl.u32 %v215, 7
    %v217 = vsub.s32 %v214, %v216
    %v218 = vrot.slane %v107, %v217
    %vm219 = vcmask 195712
    %v220 = vsel %vm219, %v218, %v213
    %v221 = vadd.s32 %v202, 4294967272
    %v222 = vlaneseq
    %v223 = vshrl.u32 %v222, 7
    %v224 = vsub.s32 %v221, %v223
    %v225 = vrot.slane %v108, %v224
    %vm226 = vcmask 261312
    %v227 = vsel %vm226, %v225, %v220
    %v228 = vlaneseq
    %v229 = vshrl.u32 %v228, 7
    %v230 = vsub.s32 %v202, %v229
    %v231 = vrot.slane %v109, %v230
    %v232 = vlaneseq
    %v233 = vshrl.u32 %v232, 7
    %v234 = vsub.s32 %v207, %v233
    %v235 = vrot.slane %v110, %v234
    %v236 = vsel %vm212, %v235, %v231
    %v237 = vlaneseq
    %v238 = vshrl.u32 %v237, 7
    %v239 = vsub.s32 %v214, %v238
    %v240 = vrot.slane %v111, %v239
    %v241 = vsel %vm219, %v240, %v236
    %v242 = vlaneseq
    %v243 = vshrl.u32 %v242, 7
    %v244 = vsub.s32 %v221, %v243
    %v245 = vrot.slane %v112, %v244
    %v246 = vsel %vm226, %v245, %v241
    %vm247 = vcmask 1041409
    %v248 = vsel %vm247, %v246, %v227
    %v258 = vlaneseq
    %v259 = vshrl.u32 %v258, 7
    %v260 = vsub.s32 %v202, %v259
    %v261 = vrot.slane %v115, %v260
    %v262 = vlaneseq
    %v263 = vshrl.u32 %v262, 7
    %v264 = vsub.s32 %v207, %v263
    %v265 = vrot.slane %v118, %v264
    %v266 = vsel %vm212, %v265, %v261
    %v267 = vlaneseq
    %v268 = vshrl.u32 %v267, 7
    %v269 = vsub.s32 %v214, %v268
    %v270 = vrot.slane %v121, %v269
    %v271 = vsel %vm219, %v270, %v266
    %v272 = vlaneseq
    %v273 = vshrl.u32 %v272, 7
    %v274 = vsub.s32 %v221, %v273
    %v275 = vrot.slane %v124, %v274
    %v276 = vsel %vm226, %v275, %v271
    %v277 = vlaneseq
    %v278 = vshrl.u32 %v277, 7
    %v279 = vsub.s32 %v202, %v278
    %v280 = vrot.slane %v127, %v279
    %v281 = vlaneseq
    %v282 = vshrl.u32 %v281, 7
    %v283 = vsub.s32 %v207, %v282
    %v284 = vrot.slane %v130, %v283
    %v285 = vsel %vm212, %v284, %v280
    %v286 = vlaneseq
    %v287 = vshrl.u32 %v286, 7
    %v288 = vsub.s32 %v214, %v287
    %v289 = vrot.slane %v133, %v288
    %v290 = vsel %vm219, %v289, %v285
    %v291 = vlaneseq
    %v292 = vshrl.u32 %v291, 7
    %v293 = vsub.s32 %v221, %v292
    %v294 = vrot.slane %v136, %v293
    %v295 = vsel %vm226, %v294, %v290
    %vm296 = vcmask 1043459
    %v297 = vsel %vm296, %v295, %v276
    %vm299 = vcmask 1041408
    %v300 = vsel %vm299, %v248, %v297
    %v309 = vlaneseq
    %v310 = vshrl.u32 %v309, 7
    %v311 = vsub.s32 %v202, %v310
    %v312 = vrot.slane %v161, %v311
    %v313 = vlaneseq
    %v314 = vshrl.u32 %v313, 7
    %v315 = vsub.s32 %v207, %v314
    %v316 = vrot.slane %v162, %v315
    %v317 = vsel %vm212, %v316, %v312
    %v318 = vlaneseq
    %v319 = vshrl.u32 %v318, 7
    %v320 = vsub.s32 %v214, %v319
    %v321 = vrot.slane %v163, %v320
    %v322 = vsel %vm219, %v321, %v317
    %v323 = vlaneseq
    %v324 = vshrl.u32 %v323, 7
    %v325 = vsub.s32 %v221, %v324
    %v326 = vrot.slane %v164, %v325
    %v327 = vsel %vm226, %v326, %v322
    %v328 = vlaneseq
    %v329 = vshrl.u32 %v328, 7
    %v330 = vsub.s32 %v202, %v329
    %v331 = vrot.slane %v165, %v330
    %v332 = vlaneseq
    %v333 = vshrl.u32 %v332, 7
    %v334 = vsub.s32 %v207, %v333
    %v335 = vrot.slane %v166, %v334
    %v336 = vsel %vm212, %v335, %v331
    %v337 = vlaneseq
    %v338 = vshrl.u32 %v337, 7
    %v339 = vsub.s32 %v214, %v338
    %v340 = vrot.slane %v167, %v339
    %v341 = vsel %vm219, %v340, %v336
    %v342 = vlaneseq
    %v343 = vshrl.u32 %v342, 7
    %v344 = vsub.s32 %v221, %v343
    %v345 = vrot.slane %v168, %v344
    %v346 = vsel %vm226, %v345, %v341
    %v347 = vsel %vm247, %v346, %v327
    %v357 = vlaneseq
    %v358 = vshrl.u32 %v357, 7
    %v359 = vsub.s32 %v202, %v358
    %v360 = vrot.slane %v171, %v359
    %v361 = vlaneseq
    %v362 = vshrl.u32 %v361, 7
    %v363 = vsub.s32 %v207, %v362
    %v364 = vrot.slane %v174, %v363
    %v365 = vsel %vm212, %v364, %v360
    %v366 = vlaneseq
    %v367 = vshrl.u32 %v366, 7
    %v368 = vsub.s32 %v214, %v367
    %v369 = vrot.slane %v177, %v368
    %v370 = vsel %vm219, %v369, %v365
    %v371 = vlaneseq
    %v372 = vshrl.u32 %v371, 7
    %v373 = vsub.s32 %v221, %v372
    %v374 = vrot.slane %v180, %v373
    %v375 = vsel %vm226, %v374, %v370
    %v376 = vlaneseq
    %v377 = vshrl.u32 %v376, 7
    %v378 = vsub.s32 %v202, %v377
    %v379 = vrot.slane %v183, %v378
    %v380 = vlaneseq
    %v381 = vshrl.u32 %v380, 7
    %v382 = vsub.s32 %v207, %v381
    %v383 = vrot.slane %v186, %v382
    %v384 = vsel %vm212, %v383, %v379
    %v385 = vlaneseq
    %v386 = vshrl.u32 %v385, 7
    %v387 = vsub.s32 %v214, %v386
    %v388 = vrot.slane %v189, %v387
    %v389 = vsel %vm219, %v388, %v384
    %v390 = vlaneseq
    %v391 = vshrl.u32 %v390, 7
    %v392 = vsub.s32 %v221, %v391
    %v393 = vrot.slane %v192, %v392
    %v394 = vsel %vm226, %v393, %v389
    %v395 = vsel %vm296, %v394, %v375
    %v397 = vsel %vm299, %v347, %v395
    %399 = vrot.lane.b32.xlu0 %v397, 32
    %v400 = vpop.permute.xlu0 %399
    %vm402 = vcmask 261120
    %v403 = vsel %vm402, %v300, %v400
    %v404 = vld [vmem:[%s2] sm:$0xff]
    %v405 = vld [vmem:[%s2 + $0x8] sm:$0xff]
    %v406 = vld [vmem:[%s2 + $0x10] sm:$0xff]
    %v407 = vld [vmem:[%s2 + $0x18] sm:$0xff]
    %v408 = vld [vmem:[%s2 + $0x20] sm:$0xff]
    %v409 = vld [vmem:[%s2 + $0x28] sm:$0xff]
    %v410 = vld [vmem:[%s2 + $0x30] sm:$0xff]
    %v411 = vld [vmem:[%s2 + $0x38] sm:$0xff]
    %vm412 = vcmask 523264
    %v414 = vsel %vm412, %v403, 0
    %416 = vmatprep.subr.mxu0 0.0
    %417 = vmatpush1.msra.mxu0 %v404
    %418 = vmatprep.subr.mxu0 0.0
    %419 = vmatpush1.msra.mxu0 %v405
    %420 = vmatprep.subr.mxu0 0.0
    %421 = vmatpush1.msra.mxu0 %v406
    %422 = vmatprep.subr.mxu0 0.0
    %423 = vmatpush1.msra.mxu0 %v407
    %424 = vmatprep.subr.mxu0 0.0
    %425 = vmatpush1.msra.mxu0 %v408
    %426 = vmatprep.subr.mxu0 0.0
    %427 = vmatpush1.msra.mxu0 %v409
    %428 = vmatprep.subr.mxu0 0.0
    %429 = vmatpush1.msra.mxu0 %v410
    %430 = vmatprep.subr.mxu0 0.0
    %431 = vmatpush1.msra.mxu0 %v411
    %432 = vmatprep.subr.mxu0 0.0
    %433 = vmatpush1.msra.mxu0 0.0
    %434 = vmatprep.subr.mxu0 0.0
    %435 = vmatpush1.msra.mxu0 0.0
    %436 = vmatprep.subr.mxu0 0.0
    %437 = vmatpush1.msra.mxu0 0.0
    %438 = vmatprep.subr.mxu0 0.0
    %439 = vmatpush1.msra.mxu0 0.0
    %440 = vmatprep.subr.mxu0 0.0
    %441 = vmatpush1.msra.mxu0 0.0
    %442 = vmatprep.subr.mxu0 0.0
    %443 = vmatpush1.msra.mxu0 0.0
    %444 = vmatprep.subr.mxu0 0.0
    %445 = vmatpush1.msra.mxu0 0.0
    %446 = vmatprep.subr.mxu0 0.0
    %447 = vmatpush1.msra.mxu0 0.0
    %448 = vmatprep.subr.mxu0 0.0
    %449 = vmatpush1.msra.mxu0 0.0
    %450 = vmatprep.subr.mxu0 0.0
    %451 = vmatpush1.msra.mxu0 0.0
    %452 = vmatprep.subr.mxu0 0.0
    %453 = vmatpush1.msra.mxu0 0.0
    %454 = vmatprep.subr.mxu0 0.0
    %455 = vmatpush1.msra.mxu0 0.0
    %456 = vmatprep.subr.mxu0 0.0
    %457 = vmatpush1.msra.mxu0 0.0
    %458 = vmatprep.subr.mxu0 0.0
    %459 = vmatpush1.msra.mxu0 0.0
    %460 = vmatprep.subr.mxu0 0.0
    %461 = vmatpush1.msra.mxu0 0.0
    %462 = vmatprep.subr.mxu0 0.0
    %463 = vmatpush1.msra.mxu0 0.0
    %464 = vmatprep.subr.mxu0 0.0
    %465 = vmatpush1.msra.mxu0 0.0
    %466 = vmatprep.subr.mxu0 0.0
    %467 = vmatpush1.msra.mxu0 0.0
    %468 = vmatprep.subr.mxu0 0.0
    %469 = vmatpush1.msra.mxu0 0.0
    %470 = vmatprep.subr.mxu0 0.0
    %471 = vmatpush1.msra.mxu0 0.0
    %472 = vmatprep.subr.mxu0 0.0
    %473 = vmatpush1.msra.mxu0 0.0
    %474 = vmatprep.subr.mxu0 0.0
    %475 = vmatpush1.msra.mxu0 0.0
    %476 = vmatprep.subr.mxu0 0.0
    %477 = vmatpush1.msra.mxu0 0.0
    %478 = vmatprep.subr.mxu0 0.0
    %479 = vmatpush1.msra.mxu0 0.0
    %480 = vmatprep.mubr.f32.mxu0 0.0
    %481 = vmatmul.mubr.f32.gmra.mrb[0].mxu0 %v414
    %v482 = vpop.f32.mrb[0].mxu0
    %v483 = vadd.f32 0.0, %v482
    %v484 = vpop.f32.mrb[0].mxu0
    %485 = vdwg.mxu0
    %v486 = vmax.f32 %v483, 0.0
    %v488 = vrot.slane %v486, 2
    %v490 = vadd.f32 %v486, %v488
    %v491 = vld [vmem:[%s3] sm:$0xf]
    %vm492 = vcmask 31744
    %v494 = vsel %vm492, %v490, 0
    %vm496 = vcmask 1043456
    %v498 = vsel %vm496, %v491, 0
    %500 = vmatprep.subr.mxu0 0.0
    %501 = vmatpush1.msra.mxu0 %v498
    %502 = vmatprep.subr.mxu0 0.0
    %503 = vmatpush1.msra.mxu0 0.0
    %504 = vmatprep.subr.mxu0 0.0
    %505 = vmatpush1.msra.mxu0 0.0
    %506 = vmatprep.subr.mxu0 0.0
    %507 = vmatpush1.msra.mxu0 0.0
    %508 = vmatprep.subr.mxu0 0.0
    %509 = vmatpush1.msra.mxu0 0.0
    %510 = vmatprep.subr.mxu0 0.0
    %511 = vmatpush1.msra.mxu0 0.0
    %512 = vmatprep.subr.mxu0 0.0
    %513 = vmatpush1.msra.mxu0 0.0
    %514 = vmatprep.subr.mxu0 0.0
    %515 = vmatpush1.msra.mxu0 0.0
    %516 = vmatprep.subr.mxu0 0.0
    %517 = vmatpush1.msra.mxu0 0.0
    %518 = vmatprep.subr.mxu0 0.0
    %519 = vmatpush1.msra.mxu0 0.0
    %520 = vmatprep.subr.mxu0 0.0
    %521 = vmatpush1.msra.mxu0 0.0
    %522 = vmatprep.subr.mxu0 0.0
    %523 = vmatpush1.msra.mxu0 0.0
    %524 = vmatprep.subr.mxu0 0.0
    %525 = vmatpush1.msra.mxu0 0.0
    %526 = vmatprep.subr.mxu0 0.0
    %527 = vmatpush1.msra.mxu0 0.0
    %528 = vmatprep.subr.mxu0 0.0
    %529 = vmatpush1.msra.mxu0 0.0
    %530 = vmatprep.subr.mxu0 0.0
    %531 = vmatpush1.msra.mxu0 0.0
    %532 = vmatprep.subr.mxu0 0.0
    %533 = vmatpush1.msra.mxu0 0.0
    %534 = vmatprep.subr.mxu0 0.0
    %535 = vmatpush1.msra.mxu0 0.0
    %536 = vmatprep.subr.mxu0 0.0
    %537 = vmatpush1.msra.mxu0 0.0
    %538 = vmatprep.subr.mxu0 0.0
    %539 = vmatpush1.msra.mxu0 0.0
    %540 = vmatprep.subr.mxu0 0.0
    %541 = vmatpush1.msra.mxu0 0.0
    %542 = vmatprep.subr.mxu0 0.0
    %543 = vmatpush1.msra.mxu0 0.0
    %544 = vmatprep.subr.mxu0 0.0
    %545 = vmatpush1.msra.mxu0 0.0
    %546 = vmatprep.subr.mxu0 0.0
    %547 = vmatpush1.msra.mxu0 0.0
    %548 = vmatprep.subr.mxu0 0.0
    %549 = vmatpush1.msra.mxu0 0.0
    %550 = vmatprep.subr.mxu0 0.0
    %551 = vmatpush1.msra.mxu0 0.0
    %552 = vmatprep.subr.mxu0 0.0
    %553 = vmatpush1.msra.mxu0 0.0
    %554 = vmatprep.subr.mxu0 0.0
    %555 = vmatpush1.msra.mxu0 0.0
    %556 = vmatprep.subr.mxu0 0.0
    %557 = vmatpush1.msra.mxu0 0.0
    %558 = vmatprep.subr.mxu0 0.0
    %559 = vmatpush1.msra.mxu0 0.0
    %560 = vmatprep.subr.mxu0 0.0
    %561 = vmatpush1.msra.mxu0 0.0
    %562 = vmatprep.subr.mxu0 0.0
    %563 = vmatpush1.msra.mxu0 0.0
    %564 = vmatprep.mubr.f32.mxu0 0.0
    %565 = vmatmul.mubr.f32.gmra.mrb[0].mxu0 %v494
    %v566 = vpop.f32.mrb[0].mxu0
    %v567 = vadd.f32 0.0, %v566
    %v568 = vpop.f32.mrb[0].mxu0
    %569 = vdwg.mxu0
    %v570 = vxor.u32 %v567, 2147483648
    %v571 = vmul.f32 %v570, 1.442695
    %v572 = vpow.pop %v571
    %v573 = vadd.f32 %v572, 1.0
    %v574 = vrcp.pop %v573
    %v575 = vmul.f32 1.0, %v574
    %v576 = vlaneseq
    %v577 = vshrl.u32 %v576, 7
    %v578 = vsub.s32 0, %v577
    %v579 = vrot.slane %v575, %v578
    %s581 = sor.u32 256, 32
    %582 = vbcast.lane.b32.xlu0 %v579, %s581
    %v583 = vpop.permute.xlu0 %582
    %s585 = sor.u32 256, 40
    %586 = vbcast.lane.b32.xlu0 %v579, %s585
    %v587 = vpop.permute.xlu0 %586
    %s589 = sor.u32 256, 48
    %590 = vbcast.lane.b32.xlu0 %v579, %s589
    %v591 = vpop.permute.xlu0 %590
    %s593 = sor.u32 256, 56
    %594 = vbcast.lane.b32.xlu0 %v579, %s593
    %v595 = vpop.permute.xlu0 %594
    %v596 = vlaneseq
    %v597 = vshrl.u32 %v596, 7
    %v598 = vsub.s32 1, %v597
    %v599 = vrot.slane %v575, %v598
    %s601 = sor.u32 256, 32
    %602 = vbcast.lane.b32.xlu0 %v599, %s601
    %v603 = vpop.permute.xlu0 %602
    %s605 = sor.u32 256, 40
    %606 = vbcast.lane.b32.xlu0 %v599, %s605
    %v607 = vpop.permute.xlu0 %606
    %s609 = sor.u32 256, 48
    %610 = vbcast.lane.b32.xlu0 %v599, %s609
    %v611 = vpop.permute.xlu0 %610
    %s613 = sor.u32 256, 56
    %614 = vbcast.lane.b32.xlu0 %v599, %s613
    %v615 = vpop.permute.xlu0 %614
    %617 = vbcast.lane.b32.xlu0 %v579, 256
    %v618 = vpop.permute.xlu0 %617
    %s620 = sor.u32 256, 8
    %621 = vbcast.lane.b32.xlu0 %v579, %s620
    %v622 = vpop.permute.xlu0 %621
    %s624 = sor.u32 256, 16
    %625 = vbcast.lane.b32.xlu0 %v579, %s624
    %v626 = vpop.permute.xlu0 %625
    %s628 = sor.u32 256, 24
    %629 = vbcast.lane.b32.xlu0 %v579, %s628
    %v630 = vpop.permute.xlu0 %629
    %632 = vbcast.lane.b32.xlu0 %v599, 256
    %v633 = vpop.permute.xlu0 %632
    %s635 = sor.u32 256, 8
    %636 = vbcast.lane.b32.xlu0 %v599, %s635
    %v637 = vpop.permute.xlu0 %636
    %s639 = sor.u32 256, 16
    %640 = vbcast.lane.b32.xlu0 %v599, %s639
    %v641 = vpop.permute.xlu0 %640
    %s643 = sor.u32 256, 24
    %644 = vbcast.lane.b32.xlu0 %v599, %s643
    %v645 = vpop.permute.xlu0 %644
    %v646 = vmul.f32 %v49, %v583
    %v647 = vmul.f32 %v50, %v583
    %v648 = vmul.f32 %v51, %v587
    %v649 = vmul.f32 %v52, %v587
    %v650 = vmul.f32 %v53, %v591
    %v651 = vmul.f32 %v54, %v591
    %v652 = vmul.f32 %v55, %v595
    %v653 = vmul.f32 %v56, %v595
    %v654 = vmul.f32 %v57, %v603
    %v655 = vmul.f32 %v58, %v603
    %v656 = vmul.f32 %v59, %v607
    %v657 = vmul.f32 %v60, %v607
    %v658 = vmul.f32 %v61, %v611
    %v659 = vmul.f32 %v62, %v611
    %v660 = vmul.f32 %v63, %v615
    %v661 = vmul.f32 %v64, %v615
    %662 = vst [vmem:[#allocation7] sm:$0xff] %v646
    %663 = vst [vmem:[#allocation7 + $0x8] sm:$0xff] %v647
    %664 = vst [vmem:[#allocation7 + $0x10] sm:$0xff] %v648
    %665 = vst [vmem:[#allocation7 + $0x18] sm:$0xff] %v649
    %666 = vst [vmem:[#allocation7 + $0x20] sm:$0xff] %v650
    %667 = vst [vmem:[#allocation7 + $0x28] sm:$0xff] %v651
    %668 = vst [vmem:[#allocation7 + $0x30] sm:$0xff] %v652
    %669 = vst [vmem:[#allocation7 + $0x38] sm:$0xff] %v653
    %670 = vst [vmem:[#allocation7 + $0x40] sm:$0xff] %v654
    %671 = vst [vmem:[#allocation7 + $0x48] sm:$0xff] %v655
    %672 = vst [vmem:[#allocation7 + $0x50] sm:$0xff] %v656
    %673 = vst [vmem:[#allocation7 + $0x58] sm:$0xff] %v657
    %674 = vst [vmem:[#allocation7 + $0x60] sm:$0xff] %v658
    %675 = vst [vmem:[#allocation7 + $0x68] sm:$0xff] %v659
    %676 = vst [vmem:[#allocation7 + $0x70] sm:$0xff] %v660
    %677 = vst [vmem:[#allocation7 + $0x78] sm:$0xff] %v661
    %v678 = vmul.f32 %v65, %v618
    %v679 = vmul.f32 %v66, %v618
    %v680 = vmul.f32 %v67, %v622
    %v681 = vmul.f32 %v68, %v622
    %v682 = vmul.f32 %v69, %v626
    %v683 = vmul.f32 %v70, %v626
    %v684 = vmul.f32 %v71, %v630
    %v685 = vmul.f32 %v72, %v630
    %v686 = vmul.f32 %v73, %v633
    %v687 = vmul.f32 %v74, %v633
    %v688 = vmul.f32 %v75, %v637
    %v689 = vmul.f32 %v76, %v637
    %v690 = vmul.f32 %v77, %v641
    %v691 = vmul.f32 %v78, %v641
    %v692 = vmul.f32 %v79, %v645
    %v693 = vmul.f32 %v80, %v645
    %694 = vst [vmem:[#allocation8] sm:$0xff] %v678
    %695 = vst [vmem:[#allocation8 + $0x8] sm:$0xff] %v679
    %696 = vst [vmem:[#allocation8 + $0x10] sm:$0xff] %v680
    %697 = vst [vmem:[#allocation8 + $0x18] sm:$0xff] %v681
    %698 = vst [vmem:[#allocation8 + $0x20] sm:$0xff] %v682
    %699 = vst [vmem:[#allocation8 + $0x28] sm:$0xff] %v683
    %700 = vst [vmem:[#allocation8 + $0x30] sm:$0xff] %v684
    %701 = vst [vmem:[#allocation8 + $0x38] sm:$0xff] %v685
    %702 = vst [vmem:[#allocation8 + $0x40] sm:$0xff] %v686
    %703 = vst [vmem:[#allocation8 + $0x48] sm:$0xff] %v687
    %704 = vst [vmem:[#allocation8 + $0x50] sm:$0xff] %v688
    %705 = vst [vmem:[#allocation8 + $0x58] sm:$0xff] %v689
    %706 = vst [vmem:[#allocation8 + $0x60] sm:$0xff] %v690
    %707 = vst [vmem:[#allocation8 + $0x68] sm:$0xff] %v691
    %708 = vst [vmem:[#allocation8 + $0x70] sm:$0xff] %v692
    %709 = vst [vmem:[#allocation8 + $0x78] sm:$0xff] %v693
    // Predicated region
    $region26: #{tpu_custom_call.1} parent=1 // pred_check
      _
    $region27: #{tpu_custom_call.1} parent=1 // pred_check_branch
      %711 = sbr.rel (0) target = $region29
    $region28: #{tpu_custom_call.1} parent=1 // pred_region
      %s713 = ssub.s32 2048, 2048
      %714 = vsyncadd [#allocation4], %s713
      %s715 = sshll.u32 [#allocation7], 4
      %s716 = int_to_ptr.vmem [resolvable:$true] %s715
      %721 = dma.vmem_to_hbm [thread:$0]  %s716, 2048, %s4, [#allocation4], 256, 256, 16
    $region29: #{tpu_custom_call.1} parent=1 // pred_fallthru
      _
    // Predicated region
    $region30: #{tpu_custom_call.1} parent=1 // pred_check
      _
    $region31: #{tpu_custom_call.1} parent=1 // pred_check_branch
      %723 = sbr.rel (0) target = $region33
    $region32: #{tpu_custom_call.1} parent=1 // pred_region
      %s725 = ssub.s32 2048, 2048
      %726 = vsyncadd [#allocation9], %s725
      %s727 = sshll.u32 [#allocation8], 4
      %s728 = int_to_ptr.vmem [resolvable:$true] %s727
      %733 = dma.vmem_to_hbm [thread:$0]  %s728, 2048, %s5, [#allocation9], 256, 256, 16
    $region33: #{tpu_custom_call.1} parent=1 // pred_fallthru
      _
    // Predicated region
    $region34: #{tpu_custom_call.1} parent=1 // pred_check
      _
    $region35: #{tpu_custom_call.1} parent=1 // pred_check_branch
      %735 = sbr.rel (0) target = $region37
    $region36: #{tpu_custom_call.1} parent=1 // pred_region
      %736 = dma.done [#allocation4], 2048
    $region37: #{tpu_custom_call.1} parent=1 // pred_fallthru
      _
    // Predicated region
    $region38: #{tpu_custom_call.1} parent=1 // pred_check
      _
    $region39: #{tpu_custom_call.1} parent=1 // pred_check_branch
      %738 = sbr.rel (0) target = $region41
    $region40: #{tpu_custom_call.1} parent=1 // pred_region
      %739 = dma.done [#allocation9], 2048
    $region41: #{tpu_custom_call.1} parent=1 // pred_fallthru
      _
    %740 = vsyncpa [#allocation3], 1
    %741 = vsyncpa [#allocation6], 1
    %742 = vsyncpa [#allocation4], 1
    %743 = vsyncpa [#allocation9], 1

</llo_original>
